<compile_context>
chip_gen: v6e
topology: v6e:2x2x1
jax: 0.10.0
libtpu: 0.0.40
codegen_flags: <defaults>
</compile_context>

<pallas_src>
import jax
import jax.numpy as jnp
from jax.experimental import pallas as pl
from jax.experimental.pallas import tpu as pltpu

D_IN, D_H, D_OUT = 100, 256, 599     # logical (PyTorch) sizes
D_IN_P, D_OUT_P = 128, 640           # lane-dense padded sizes (internal only)


def _round_up(n, m):
    return ((n + m - 1) // m) * m


def _gen_kernel(x_ref, w1_ref, b1_ref, w2_ref, b2_ref, w3_ref, b3_ref, o_ref):
    """Fused 3-layer MLP on one batch tile; all operands resident in VMEM.

    Matmul operands may be bf16 (MXU-native); bias-add / ReLU run in f32 on the
    VPU, casting back to the compute dtype only when feeding the next dot.
    Output ref is 599 wide; the dot runs on the 640-wide padded weights and the
    store drops the 41 padded columns (one masked column group).
    """
    cdt = w1_ref.dtype
    h = jnp.dot(x_ref[...], w1_ref[...], preferred_element_type=jnp.float32)
    h = jnp.maximum(h + b1_ref[...], 0.0)
    h = jnp.dot(h.astype(cdt), w2_ref[...], preferred_element_type=jnp.float32)
    h = jnp.maximum(h + b2_ref[...], 0.0)
    o = jnp.dot(h.astype(cdt), w3_ref[...], preferred_element_type=jnp.float32)
    o = o + b3_ref[...]
    o_ref[...] = o[:, : o_ref.shape[1]].astype(o_ref.dtype)


def prepare_params(params, *, use_bf16=True):
    """One-time padding / dtype conversion of the weights (hoisted out of the
    per-call hot path).  params = (w1, b1, w2, b2, w3, b3), weights stored
    (in_features, out_features)."""
    w1, b1, w2, b2, w3, b3 = params
    cdt = jnp.bfloat16 if use_bf16 else jnp.float32
    w1_p = jnp.zeros((D_IN_P, D_H), cdt).at[:D_IN, :].set(w1.astype(cdt))
    w2_p = w2.astype(cdt)
    w3_p = jnp.zeros((D_H, D_OUT_P), cdt).at[:, :D_OUT].set(w3.astype(cdt))
    b1_p = b1.reshape(1, D_H).astype(jnp.float32)
    b2_p = b2.reshape(1, D_H).astype(jnp.float32)
    b3_p = jnp.zeros((1, D_OUT_P), jnp.float32).at[:, :D_OUT].set(
        b3.reshape(1, D_OUT).astype(jnp.float32)
    )
    return (w1_p, b1_p, w2_p, b2_p, w3_p, b3_p)


def generator_forward(x, prepared_params, *, batch_tile=None,
                      out_dtype=jnp.float32):
    """x: (B, 100) float32 -> (B, 599) `out_dtype`.

    `prepared_params` comes from `prepare_params`.  Set out_dtype=jnp.bfloat16
    to halve output HBM writeback when the consumer tolerates bf16.
    """
    w1_p, b1_p, w2_p, b2_p, w3_p, b3_p = prepared_params
    cdt = w1_p.dtype
    B = x.shape[0]
    B8 = _round_up(max(B, 1), 8)

    # Tile heuristic: single tile for small batches; otherwise >= 2 tiles so
    # the parallel grid axis can shard across v7x's two TensorCores, capped at
    # 2048 rows/tile (VMEM-safe under the 32 MiB limit on every generation).
    if batch_tile is None:
        if B8 <= 256:
            batch_tile = B8
        else:
            batch_tile = min(2048, _round_up(-(-B8 // 2), 8))
    batch_tile = max(8, _round_up(batch_tile, 8))
    B_pad = _round_up(B, batch_tile)
    grid = (B_pad // batch_tile,)

    # Per-call input padding only: (B,100) -> (B_pad,128), zero rows / zero K
    # columns contribute nothing to the first matmul.
    x_p = jnp.zeros((B_pad, D_IN_P), cdt).at[:B, :D_IN].set(x.astype(cdt))

    # x/out tiled over the batch; weights & biases use constant index_maps so
    # they stay resident in VMEM across grid steps (no re-DMA).
    in_specs = [
        pl.BlockSpec((batch_tile, D_IN_P), lambda i: (i, 0)),
        pl.BlockSpec((D_IN_P, D_H), lambda i: (0, 0)),
        pl.BlockSpec((1, D_H), lambda i: (0, 0)),
        pl.BlockSpec((D_H, D_H), lambda i: (0, 0)),
        pl.BlockSpec((1, D_H), lambda i: (0, 0)),
        pl.BlockSpec((D_H, D_OUT_P), lambda i: (0, 0)),
        pl.BlockSpec((1, D_OUT_P), lambda i: (0, 0)),
    ]
    # Output is 599 wide directly (599 == full array dim -> legal block), so no
    # post-call column slice / second HBM pass is needed.
    out_specs = pl.BlockSpec((batch_tile, D_OUT), lambda i: (i, 0))

    out = pl.pallas_call(
        _gen_kernel,
        out_shape=jax.ShapeDtypeStruct((B_pad, D_OUT), out_dtype),
        grid=grid,
        in_specs=in_specs,
        out_specs=out_specs,
        compiler_params=pltpu.CompilerParams(
            dimension_semantics=("parallel",),
            vmem_limit_bytes=32 * 1024 * 1024,
        ),
    )(x_p, w1_p, b1_p, w2_p, b2_p, w3_p, b3_p)

    if B_pad != B:
        out = out[:B]   # only ragged batch rows; feature dim is already exact
    return out


def init_params(key):
    """Deterministic init mimicking PyTorch Linear default (U(+-1/sqrt(fan_in))).
    Weights stored as (in_features, out_features)."""
    ks = jax.random.split(key, 6)

    def linear(kw, kb, fan_in, fan_out):
        bound = 1.0 / jnp.sqrt(fan_in)
        w = jax.random.uniform(kw, (fan_in, fan_out), jnp.float32, -bound, bound)
        b = jax.random.uniform(kb, (1, fan_out), jnp.float32, -bound, bound)
        return w, b

    w1, b1 = linear(ks[0], ks[1], D_IN, D_H)
    w2, b2 = linear(ks[2], ks[3], D_H, D_H)
    w3, b3 = linear(ks[4], ks[5], D_H, D_OUT)
    return (w1, b1, w2, b2, w3, b3)


def reference_forward(x, params, use_bf16=True):
    """Pure-JAX reference following the same dtype path as the kernel."""
    w1, b1, w2, b2, w3, b3 = params
    cdt = jnp.bfloat16 if use_bf16 else jnp.float32
    h = jnp.dot(x.astype(cdt), w1.astype(cdt),
                preferred_element_type=jnp.float32) + b1.reshape(1, -1)
    h = jnp.maximum(h, 0.0)
    h = jnp.dot(h.astype(cdt), w2.astype(cdt),
                preferred_element_type=jnp.float32) + b2.reshape(1, -1)
    h = jnp.maximum(h, 0.0)
    return jnp.dot(h.astype(cdt), w3.astype(cdt),
                   preferred_element_type=jnp.float32) + b3.reshape(1, -1)


if __name__ == "__main__":
    key = jax.random.PRNGKey(0)
    k_params, k_x, k_x2 = jax.random.split(key, 3)

    params = init_params(k_params)
    prepared = prepare_params(params, use_bf16=True)

    # Small batch: single tile, no padding slice.
    B = 8
    x = jax.random.normal(k_x, (B, D_IN), jnp.float32)
    out = jax.block_until_ready(generator_forward(x, prepared))
    ref = reference_forward(x, params, use_bf16=True)
    assert out.shape == (B, D_OUT), out.shape
    assert jnp.allclose(out, ref, atol=2e-2, rtol=2e-2), "mismatch vs reference"

    # Ragged batch: exercises multi-tile grid (2 tiles) + row padding path.
    B2 = 300
    x2 = jax.random.normal(k_x2, (B2, D_IN), jnp.float32)
    out2 = jax.block_until_ready(generator_forward(x2, prepared))
    ref2 = reference_forward(x2, params, use_bf16=True)
    assert out2.shape == (B2, D_OUT), out2.shape
    assert jnp.allclose(out2, ref2, atol=2e-2, rtol=2e-2), "mismatch vs reference"

    print("KERNEL_OK")
</pallas_src>

<mosaic_0001>
module attributes {stable_mosaic.version = 11 : i64} {
  func.func @_gen_kernel(%arg0: i32, %arg1: memref<8x128xbf16, #tpu.memory_space<vmem>>, %arg2: memref<128x256xbf16, #tpu.memory_space<vmem>>, %arg3: memref<1x256xf32, #tpu.memory_space<vmem>>, %arg4: memref<256x256xbf16, #tpu.memory_space<vmem>>, %arg5: memref<1x256xf32, #tpu.memory_space<vmem>>, %arg6: memref<256x640xbf16, #tpu.memory_space<vmem>>, %arg7: memref<1x640xf32, #tpu.memory_space<vmem>>, %arg8: memref<8x599xf32, #tpu.memory_space<vmem>>) attributes {dimension_semantics = [#tpu.dimension_semantics<parallel>], iteration_bounds = array<i64: 1>, scalar_prefetch = 0 : i64, scratch_operands = 0 : i64, tpu.core_type = #tpu.core_type<tc>, window_params = [{transform_indices = @transform_0, window_bounds = array<i64: 8, 128>}, {pipeline_mode = #tpu.pipeline_mode<synchronous>, transform_indices = @transform_1, window_bounds = array<i64: 128, 256>}, {pipeline_mode = #tpu.pipeline_mode<synchronous>, transform_indices = @transform_2, window_bounds = array<i64: 1, 256>}, {pipeline_mode = #tpu.pipeline_mode<synchronous>, transform_indices = @transform_3, window_bounds = array<i64: 256, 256>}, {pipeline_mode = #tpu.pipeline_mode<synchronous>, transform_indices = @transform_4, window_bounds = array<i64: 1, 256>}, {pipeline_mode = #tpu.pipeline_mode<synchronous>, transform_indices = @transform_5, window_bounds = array<i64: 256, 640>}, {pipeline_mode = #tpu.pipeline_mode<synchronous>, transform_indices = @transform_6, window_bounds = array<i64: 1, 640>}, {transform_indices = @transform_7, window_bounds = array<i64: 8, 599>}]} {
    %c0 = arith.constant 0 : index
    %c0_0 = arith.constant 0 : index
    %0 = vector.load %arg1[%c0, %c0_0] : memref<8x128xbf16, #tpu.memory_space<vmem>>, vector<8x128xbf16>
    %c0_1 = arith.constant 0 : index
    %c0_2 = arith.constant 0 : index
    %1 = vector.load %arg2[%c0_1, %c0_2] : memref<128x256xbf16, #tpu.memory_space<vmem>>, vector<128x256xbf16>
    %cst = arith.constant dense<0.000000e+00> : vector<8x256xf32>
    %2 = tpu.matmul %0, %1, %cst {dimension_numbers = #tpu.dot_dimension_numbers<[1], [0], [0], [1], [0, 0, 1, 1], [], []>} : vector<8x128xbf16>, vector<128x256xbf16>, vector<8x256xf32> -> vector<8x256xf32>
    %c0_3 = arith.constant 0 : index
    %c0_4 = arith.constant 0 : index
    %3 = vector.load %arg3[%c0_3, %c0_4] : memref<1x256xf32, #tpu.memory_space<vmem>>, vector<1x256xf32>
    %4 = vector.broadcast %3 : vector<1x256xf32> to vector<8x256xf32>
    %5 = arith.addf %2, %4 : vector<8x256xf32>
    %cst_5 = arith.constant 0.000000e+00 : f32
    %6 = vector.broadcast %cst_5 : f32 to vector<8x256xf32>
    %7 = arith.maximumf %5, %6 : vector<8x256xf32>
    %8 = arith.truncf %7 : vector<8x256xf32> to vector<8x256xbf16>
    %c0_6 = arith.constant 0 : index
    %c0_7 = arith.constant 0 : index
    %9 = vector.load %arg4[%c0_6, %c0_7] : memref<256x256xbf16, #tpu.memory_space<vmem>>, vector<256x256xbf16>
    %cst_8 = arith.constant dense<0.000000e+00> : vector<8x256xf32>
    %10 = tpu.matmul %8, %9, %cst_8 {dimension_numbers = #tpu.dot_dimension_numbers<[1], [0], [0], [1], [0, 0, 1, 1], [], []>} : vector<8x256xbf16>, vector<256x256xbf16>, vector<8x256xf32> -> vector<8x256xf32>
    %c0_9 = arith.constant 0 : index
    %c0_10 = arith.constant 0 : index
    %11 = vector.load %arg5[%c0_9, %c0_10] : memref<1x256xf32, #tpu.memory_space<vmem>>, vector<1x256xf32>
    %12 = vector.broadcast %11 : vector<1x256xf32> to vector<8x256xf32>
    %13 = arith.addf %10, %12 : vector<8x256xf32>
    %cst_11 = arith.constant 0.000000e+00 : f32
    %14 = vector.broadcast %cst_11 : f32 to vector<8x256xf32>
    %15 = arith.maximumf %13, %14 : vector<8x256xf32>
    %16 = arith.truncf %15 : vector<8x256xf32> to vector<8x256xbf16>
    %c0_12 = arith.constant 0 : index
    %c0_13 = arith.constant 0 : index
    %17 = vector.load %arg6[%c0_12, %c0_13] : memref<256x640xbf16, #tpu.memory_space<vmem>>, vector<256x640xbf16>
    %cst_14 = arith.constant dense<0.000000e+00> : vector<8x640xf32>
    %18 = tpu.matmul %16, %17, %cst_14 {dimension_numbers = #tpu.dot_dimension_numbers<[1], [0], [0], [1], [0, 0, 1, 1], [], []>} : vector<8x256xbf16>, vector<256x640xbf16>, vector<8x640xf32> -> vector<8x640xf32>
    %c0_15 = arith.constant 0 : index
    %c0_16 = arith.constant 0 : index
    %19 = vector.load %arg7[%c0_15, %c0_16] : memref<1x640xf32, #tpu.memory_space<vmem>>, vector<1x640xf32>
    %20 = vector.broadcast %19 : vector<1x640xf32> to vector<8x640xf32>
    %21 = arith.addf %18, %20 : vector<8x640xf32>
    %22 = vector.extract_strided_slice %21 {offsets = [0, 0], sizes = [8, 599], strides = [1, 1]} : vector<8x640xf32> to vector<8x599xf32>
    %c0_17 = arith.constant 0 : index
    %c0_18 = arith.constant 0 : index
    %23 = vector.load %arg8[%c0_17, %c0_18] : memref<8x599xf32, #tpu.memory_space<vmem>>, vector<8x599xf32>
    tpu.vector_store %arg8[%c0_17, %c0_18], %22 {strides = array<i32>} : memref<8x599xf32, #tpu.memory_space<vmem>>, vector<8x599xf32>,
    return
  }
  func.func @transform_0(%arg0: i32) -> (i32, i32) {
    %c0_i32 = arith.constant 0 : i32
    %c0_i32_0 = arith.constant 0 : i32
    return %arg0, %c0_i32 : i32, i32
  }
  func.func @transform_1(%arg0: i32) -> (i32, i32) {
    %c0_i32 = arith.constant 0 : i32
    %c0_i32_0 = arith.constant 0 : i32
    %c0_i32_1 = arith.constant 0 : i32
    return %c0_i32, %c0_i32_0 : i32, i32
  }
  func.func @transform_2(%arg0: i32) -> (i32, i32) {
    %c0_i32 = arith.constant 0 : i32
    %c0_i32_0 = arith.constant 0 : i32
    %c0_i32_1 = arith.constant 0 : i32
    return %c0_i32, %c0_i32_0 : i32, i32
  }
  func.func @transform_3(%arg0: i32) -> (i32, i32) {
    %c0_i32 = arith.constant 0 : i32
    %c0_i32_0 = arith.constant 0 : i32
    %c0_i32_1 = arith.constant 0 : i32
    return %c0_i32, %c0_i32_0 : i32, i32
  }
  func.func @transform_4(%arg0: i32) -> (i32, i32) {
    %c0_i32 = arith.constant 0 : i32
    %c0_i32_0 = arith.constant 0 : i32
    %c0_i32_1 = arith.constant 0 : i32
    return %c0_i32, %c0_i32_0 : i32, i32
  }
  func.func @transform_5(%arg0: i32) -> (i32, i32) {
    %c0_i32 = arith.constant 0 : i32
    %c0_i32_0 = arith.constant 0 : i32
    %c0_i32_1 = arith.constant 0 : i32
    return %c0_i32, %c0_i32_0 : i32, i32
  }
  func.func @transform_6(%arg0: i32) -> (i32, i32) {
    %c0_i32 = arith.constant 0 : i32
    %c0_i32_0 = arith.constant 0 : i32
    %c0_i32_1 = arith.constant 0 : i32
    return %c0_i32, %c0_i32_0 : i32, i32
  }
  func.func @transform_7(%arg0: i32) -> (i32, i32) {
    %c0_i32 = arith.constant 0 : i32
    %c0_i32_0 = arith.constant 0 : i32
    return %arg0, %c0_i32 : i32, i32
  }
}

</mosaic_0001>

<llo_original>
// kernel: tpu_custom_call.1
$region0: #{tpu_custom_call.1}
  #allocation0 [shape = 'u32[]', space=smem, size = 0x4, offset = 0x4, fixed_abs, tag = 'smem constant byte address 0x4 - core index']
  #allocation1 [shape = 'u32[144,128]{1,0:T(1,128)}', space=vmem, size = 0x12000, scoped, tag = 'internal scratch']
  %s0 = inlined_call_operand.hbm [shape: bf16[8,128], index: 0, kind: input, shape index: {}]
  %s1 = inlined_call_operand.hbm [shape: bf16[128,256], index: 1, kind: input, shape index: {}]
  %s2 = inlined_call_operand.vmem [shape: f32[1,256], index: 2, kind: input, shape index: {}]
  %s3 = inlined_call_operand.hbm [shape: bf16[256,256], index: 3, kind: input, shape index: {}]
  %s4 = inlined_call_operand.vmem [shape: f32[1,256], index: 4, kind: input, shape index: {}]
  %s5 = inlined_call_operand.hbm [shape: bf16[256,640], index: 5, kind: input, shape index: {}]
  %s6 = inlined_call_operand.vmem [shape: f32[1,640], index: 6, kind: input, shape index: {}]
  %s7 = inlined_call_operand.hbm [shape: f32[8,599], index: 7, kind: output, shape index: {}]
  %s8 = sld [smem:[#allocation0]]
  $region54: #{tpu_custom_call.1} parent=0
    _
  %s10 = ssub.s32 1, %s8
  %s11 = scalar_select 0, %s10, %s8
  $region1: #{tpu_custom_call.1} parent=0
    #allocation2 [shape = 'u8[2048]{0}', space=vmem, size = 0x800, scoped, tag = 'input window, operand 0, single buffered']
    #allocation3 [shape = 's32[1]{0}', space=sflag, size = 0x4, scoped, tag = 'scoped memory for tpu_custom_call.1']
    #allocation4 [shape = 's32[1]{0}', space=sflag, size = 0x4, scoped, tag = 'scoped memory for tpu_custom_call.1']
    #allocation5 [shape = 'u8[65536]{0}', space=vmem, size = 0x10000, scoped, tag = 'input window, operand 1, single buffered']
    #allocation6 [shape = 's32[1]{0}', space=sflag, size = 0x4, scoped, tag = 'scoped memory for tpu_custom_call.1']
    #allocation7 [shape = 'u8[131072]{0}', space=vmem, size = 0x20000, scoped, tag = 'input window, operand 3, single buffered']
    #allocation8 [shape = 'u8[327680]{0}', space=vmem, size = 0x50000, scoped, tag = 'input window, operand 5, single buffered']
    #allocation9 [shape = 's32[1]{0}', space=sflag, size = 0x4, scoped, tag = 'scoped memory for tpu_custom_call.1']
    #allocation10 [shape = 'u8[20480]{0}', space=vmem, size = 0x5000, scoped, tag = 'output window, operand 0, single buffered']
    %12 = vsyncpa [#allocation3], 0
    %13 = vsyncpa [#allocation6], 0
    %14 = vsyncpa [#allocation9], 0
    %15 = vsyncpa [#allocation4], 0
    // Predicated region
    $region2: #{tpu_custom_call.1} parent=1 // pred_check
      _
    $region3: #{tpu_custom_call.1} parent=1 // pred_check_branch
      %17 = sbr.rel (0) target = $region5
    $region4: #{tpu_custom_call.1} parent=1 // pred_region
      %s19 = ssub.s32 64, 64
      %20 = vsyncadd [#allocation3], %s19
      %s22 = sshll.u32 [#allocation2], 4
      %s23 = int_to_ptr.vmem [resolvable:$true] %s22
      %25 = dma.hbm_to_vmem [thread:$0]  %s0, 64, %s23, [#allocation3]
    $region5: #{tpu_custom_call.1} parent=1 // pred_fallthru
      _
    // Predicated region
    $region6: #{tpu_custom_call.1} parent=1 // pred_check
      _
    $region7: #{tpu_custom_call.1} parent=1 // pred_check_branch
      %27 = sbr.rel (0) target = $region9
    $region8: #{tpu_custom_call.1} parent=1 // pred_region
      %s29 = ssub.s32 2048, 2048
      %30 = vsyncadd [#allocation6], %s29
      %s31 = sshll.u32 [#allocation5], 4
      %s32 = int_to_ptr.vmem [resolvable:$true] %s31
      %37 = dma.hbm_to_vmem [thread:$0]  %s1, 2048, %s32, [#allocation6], 128, 128, 8
    $region9: #{tpu_custom_call.1} parent=1 // pred_fallthru
      _
    // Predicated region
    $region10: #{tpu_custom_call.1} parent=1 // pred_check
      _
    $region11: #{tpu_custom_call.1} parent=1 // pred_check_branch
      %39 = sbr.rel (0) target = $region13
    $region12: #{tpu_custom_call.1} parent=1 // pred_region
      _
    $region13: #{tpu_custom_call.1} parent=1 // pred_fallthru
      _
    // Predicated region
    $region14: #{tpu_custom_call.1} parent=1 // pred_check
      _
    $region15: #{tpu_custom_call.1} parent=1 // pred_check_branch
      %41 = sbr.rel (0) target = $region17
    $region16: #{tpu_custom_call.1} parent=1 // pred_region
      %s43 = ssub.s32 4096, 4096
      %44 = vsyncadd [#allocation6], %s43
      %s45 = sshll.u32 [#allocation7], 4
      %s46 = int_to_ptr.vmem [resolvable:$true] %s45
      %51 = dma.hbm_to_vmem [thread:$0]  %s3, 4096, %s46, [#allocation6], 128, 128, 8
    $region17: #{tpu_custom_call.1} parent=1 // pred_fallthru
      _
    // Predicated region
    $region18: #{tpu_custom_call.1} parent=1 // pred_check
      _
    $region19: #{tpu_custom_call.1} parent=1 // pred_check_branch
      %53 = sbr.rel (0) target = $region21
    $region20: #{tpu_custom_call.1} parent=1 // pred_region
      _
    $region21: #{tpu_custom_call.1} parent=1 // pred_fallthru
      _
    // Predicated region
    $region22: #{tpu_custom_call.1} parent=1 // pred_check
      _
    $region23: #{tpu_custom_call.1} parent=1 // pred_check_branch
      %55 = sbr.rel (0) target = $region25
    $region24: #{tpu_custom_call.1} parent=1 // pred_region
      %s57 = ssub.s32 10240, 10240
      %58 = vsyncadd [#allocation9], %s57
      %s59 = sshll.u32 [#allocation8], 4
      %s60 = int_to_ptr.vmem [resolvable:$true] %s59
      %65 = dma.hbm_to_vmem [thread:$0]  %s5, 10240, %s60, [#allocation9], 320, 320, 20
    $region25: #{tpu_custom_call.1} parent=1 // pred_fallthru
      _
    // Predicated region
    $region26: #{tpu_custom_call.1} parent=1 // pred_check
      _
    $region27: #{tpu_custom_call.1} parent=1 // pred_check_branch
      %67 = sbr.rel (0) target = $region29
    $region28: #{tpu_custom_call.1} parent=1 // pred_region
      _
    $region29: #{tpu_custom_call.1} parent=1 // pred_fallthru
      _
    // Predicated region
    $region30: #{tpu_custom_call.1} parent=1 // pred_check
      _
    $region31: #{tpu_custom_call.1} parent=1 // pred_check_branch
      %69 = sbr.rel (0) target = $region33
    $region32: #{tpu_custom_call.1} parent=1 // pred_region
      %70 = dma.done [#allocation3], 64
    $region33: #{tpu_custom_call.1} parent=1 // pred_fallthru
      _
    // Predicated region
    $region34: #{tpu_custom_call.1} parent=1 // pred_check
      _
    $region35: #{tpu_custom_call.1} parent=1 // pred_check_branch
      %72 = sbr.rel (0) target = $region37
    $region36: #{tpu_custom_call.1} parent=1 // pred_region
      %73 = dma.done [#allocation6], 2048
    $region37: #{tpu_custom_call.1} parent=1 // pred_fallthru
      _
    // Predicated region
    $region38: #{tpu_custom_call.1} parent=1 // pred_check
      _
    $region39: #{tpu_custom_call.1} parent=1 // pred_check_branch
      %75 = sbr.rel (0) target = $region41
    $region40: #{tpu_custom_call.1} parent=1 // pred_region
      %76 = dma.done [#allocation6], 4096
    $region41: #{tpu_custom_call.1} parent=1 // pred_fallthru
      _
    // Predicated region
    $region42: #{tpu_custom_call.1} parent=1 // pred_check
      _
    $region43: #{tpu_custom_call.1} parent=1 // pred_check_branch
      %78 = sbr.rel (0) target = $region45
    $region44: #{tpu_custom_call.1} parent=1 // pred_region
      %79 = dma.done [#allocation9], 10240
    $region45: #{tpu_custom_call.1} parent=1 // pred_fallthru
      _
    %v81 = vld [vmem:[#allocation2] sm:$0xf]
    %v82 = vld [vmem:[#allocation5] sm:$0xff]
    %v83 = vld [vmem:[#allocation5 + $0x8] sm:$0xff]
    %v84 = vld [vmem:[#allocation5 + $0x10] sm:$0xff]
    %v85 = vld [vmem:[#allocation5 + $0x18] sm:$0xff]
    %v86 = vld [vmem:[#allocation5 + $0x20] sm:$0xff]
    %v87 = vld [vmem:[#allocation5 + $0x28] sm:$0xff]
    %v88 = vld [vmem:[#allocation5 + $0x30] sm:$0xff]
    %v89 = vld [vmem:[#allocation5 + $0x38] sm:$0xff]
    %v90 = vld [vmem:[#allocation5 + $0x40] sm:$0xff]
    %v91 = vld [vmem:[#allocation5 + $0x48] sm:$0xff]
    %v92 = vld [vmem:[#allocation5 + $0x50] sm:$0xff]
    %v93 = vld [vmem:[#allocation5 + $0x58] sm:$0xff]
    %v94 = vld [vmem:[#allocation5 + $0x60] sm:$0xff]
    %v95 = vld [vmem:[#allocation5 + $0x68] sm:$0xff]
    %v96 = vld [vmem:[#allocation5 + $0x70] sm:$0xff]
    %v97 = vld [vmem:[#allocation5 + $0x78] sm:$0xff]
    %v98 = vld [vmem:[%s2] sm:$0x3]
    %v100 = vlaneseq
    %v101 = vshrl.u32 %v100, 7
    %v102 = vsub.s32 0, %v101
    %v103 = vrot.slane %v98, %v102
    %v104 = vlaneseq
    %v105 = vshrl.u32 %v104, 7
    %v106 = vsub.s32 1, %v105
    %v107 = vrot.slane %v98, %v106
    %v126 = vunpack.c.l.b16 %v82
    %v127 = vunpack.c.h.b16 %v82
    %v128 = vunpack.c.l.b16 %v83
    %v129 = vunpack.c.h.b16 %v83
    %v130 = vunpack.c.l.b16 %v84
    %v131 = vunpack.c.h.b16 %v84
    %v132 = vunpack.c.l.b16 %v85
    %v133 = vunpack.c.h.b16 %v85
    %v134 = vunpack.c.l.b16 %v86
    %v135 = vunpack.c.h.b16 %v86
    %v136 = vunpack.c.l.b16 %v87
    %v137 = vunpack.c.h.b16 %v87
    %v138 = vunpack.c.l.b16 %v88
    %v139 = vunpack.c.h.b16 %v88
    %v140 = vunpack.c.l.b16 %v89
    %v141 = vunpack.c.h.b16 %v89
    %v142 = vunpack.c.l.b16 %v90
    %v143 = vunpack.c.h.b16 %v90
    %v144 = vunpack.c.l.b16 %v91
    %v145 = vunpack.c.h.b16 %v91
    %v146 = vunpack.c.l.b16 %v92
    %v147 = vunpack.c.h.b16 %v92
    %v148 = vunpack.c.l.b16 %v93
    %v149 = vunpack.c.h.b16 %v93
    %v150 = vunpack.c.l.b16 %v94
    %v151 = vunpack.c.h.b16 %v94
    %v152 = vunpack.c.l.b16 %v95
    %v153 = vunpack.c.h.b16 %v95
    %v154 = vunpack.c.l.b16 %v96
    %v155 = vunpack.c.h.b16 %v96
    %v156 = vunpack.c.l.b16 %v97
    %v157 = vunpack.c.h.b16 %v97
    %v158 = vpack.c.b16 %v128, %v126
    %v159 = vpack.c.b16 %v129, %v127
    %v160 = vpack.c.b16 %v132, %v130
    %v161 = vpack.c.b16 %v133, %v131
    %v162 = vpack.c.b16 %v136, %v134
    %v163 = vpack.c.b16 %v137, %v135
    %v164 = vpack.c.b16 %v140, %v138
    %v165 = vpack.c.b16 %v141, %v139
    %v166 = vpack.c.b16 %v144, %v142
    %v167 = vpack.c.b16 %v145, %v143
    %v168 = vpack.c.b16 %v148, %v146
    %v169 = vpack.c.b16 %v149, %v147
    %v170 = vpack.c.b16 %v152, %v150
    %v171 = vpack.c.b16 %v153, %v151
    %v172 = vpack.c.b16 %v156, %v154
    %v173 = vpack.c.b16 %v157, %v155
    %190 = vmatprep.subr.bf16.mxu0 %v173
    %191 = vmatpush1.bf16.msra.mxu0 %v172
    %192 = vmatprep.subr.bf16.mxu0 %v171
    %193 = vmatpush1.bf16.msra.mxu0 %v170
    %194 = vmatprep.subr.bf16.mxu0 %v169
    %195 = vmatpush1.bf16.msra.mxu0 %v168
    %196 = vmatprep.subr.bf16.mxu0 %v167
    %197 = vmatpush1.bf16.msra.mxu0 %v166
    %198 = vmatprep.subr.bf16.mxu0 %v165
    %199 = vmatpush1.bf16.msra.mxu0 %v164
    %200 = vmatprep.subr.bf16.mxu0 %v163
    %201 = vmatpush1.bf16.msra.mxu0 %v162
    %202 = vmatprep.subr.bf16.mxu0 %v161
    %203 = vmatpush1.bf16.msra.mxu0 %v160
    %204 = vmatprep.subr.bf16.mxu0 %v159
    %205 = vmatpush1.bf16.msra.mxu0 %v158
    %206 = vmatprep.subr.bf16.mxu0 0
    %207 = vmatpush2.bf16.msra.mxu0 0
    %208 = vmatprep.subr.bf16.mxu0 0
    %209 = vmatpush2.bf16.msra.mxu0 0
    %210 = vmatprep.subr.bf16.mxu0 0
    %211 = vmatpush2.bf16.msra.mxu0 0
    %212 = vmatprep.subr.bf16.mxu0 0
    %213 = vmatpush2.bf16.msra.mxu0 0
    %214 = vmatprep.subr.bf16.mxu0 0
    %215 = vmatpush2.bf16.msra.mxu0 0
    %216 = vmatprep.subr.bf16.mxu0 0
    %217 = vmatpush2.bf16.msra.mxu0 0
    %218 = vmatprep.subr.bf16.mxu0 0
    %219 = vmatpush2.bf16.msra.mxu0 0
    %220 = vmatprep.subr.bf16.mxu0 0
    %221 = vmatpush2.bf16.msra.mxu0 0
    %222 = vmatprep.mubr.bf16.mxu0 0
    %223 = vmatmul.mubr.bf16.gmra.mxu0 %v81
    %v224 = vpop.f32.mrf.mxu0
    %v225 = vadd.f32 %v103, %v224
    %v226 = vpop.f32.mrf.mxu0
    %v227 = vadd.f32 %v107, %v226
    %v228 = vpop.f32.mrf.mxu0
    %v229 = vpop.f32.mrf.mxu0
    %230 = vdwg.mxu0
    %v231 = vmax.f32 %v225, 0.0
    %v232 = vmax.f32 %v227, 0.0
    %v233 = vpack.c.bf16 %v231, %v231
    %v234 = vpack.c.bf16 %v232, %v232
    %v235 = vld [vmem:[#allocation7] sm:$0xff]
    %v236 = vld [vmem:[#allocation7 + $0x8] sm:$0xff]
    %v237 = vld [vmem:[#allocation7 + $0x10] sm:$0xff]
    %v238 = vld [vmem:[#allocation7 + $0x18] sm:$0xff]
    %v239 = vld [vmem:[#allocation7 + $0x20] sm:$0xff]
    %v240 = vld [vmem:[#allocation7 + $0x28] sm:$0xff]
    %v241 = vld [vmem:[#allocation7 + $0x30] sm:$0xff]
    %v242 = vld [vmem:[#allocation7 + $0x38] sm:$0xff]
    %v243 = vld [vmem:[#allocation7 + $0x40] sm:$0xff]
    %v244 = vld [vmem:[#allocation7 + $0x48] sm:$0xff]
    %v245 = vld [vmem:[#allocation7 + $0x50] sm:$0xff]
    %v246 = vld [vmem:[#allocation7 + $0x58] sm:$0xff]
    %v247 = vld [vmem:[#allocation7 + $0x60] sm:$0xff]
    %v248 = vld [vmem:[#allocation7 + $0x68] sm:$0xff]
    %v249 = vld [vmem:[#allocation7 + $0x70] sm:$0xff]
    %v250 = vld [vmem:[#allocation7 + $0x78] sm:$0xff]
    %v251 = vld [vmem:[#allocation7 + $0x80] sm:$0xff]
    %v252 = vld [vmem:[#allocation7 + $0x88] sm:$0xff]
    %v253 = vld [vmem:[#allocation7 + $0x90] sm:$0xff]
    %v254 = vld [vmem:[#allocation7 + $0x98] sm:$0xff]
    %v255 = vld [vmem:[#allocation7 + $0xa0] sm:$0xff]
    %v256 = vld [vmem:[#allocation7 + $0xa8] sm:$0xff]
    %v257 = vld [vmem:[#allocation7 + $0xb0] sm:$0xff]
    %v258 = vld [vmem:[#allocation7 + $0xb8] sm:$0xff]
    %v259 = vld [vmem:[#allocation7 + $0xc0] sm:$0xff]
    %v260 = vld [vmem:[#allocation7 + $0xc8] sm:$0xff]
    %v261 = vld [vmem:[#allocation7 + $0xd0] sm:$0xff]
    %v262 = vld [vmem:[#allocation7 + $0xd8] sm:$0xff]
    %v263 = vld [vmem:[#allocation7 + $0xe0] sm:$0xff]
    %v264 = vld [vmem:[#allocation7 + $0xe8] sm:$0xff]
    %v265 = vld [vmem:[#allocation7 + $0xf0] sm:$0xff]
    %v266 = vld [vmem:[#allocation7 + $0xf8] sm:$0xff]
    %v267 = vld [vmem:[%s4] sm:$0x3]
    %v269 = vlaneseq
    %v270 = vshrl.u32 %v269, 7
    %v271 = vsub.s32 0, %v270
    %v272 = vrot.slane %v267, %v271
    %v273 = vlaneseq
    %v274 = vshrl.u32 %v273, 7
    %v275 = vsub.s32 1, %v274
    %v276 = vrot.slane %v267, %v275
    %v311 = vunpack.c.l.b16 %v235
    %v312 = vunpack.c.h.b16 %v235
    %v313 = vunpack.c.l.b16 %v236
    %v314 = vunpack.c.h.b16 %v236
    %v315 = vunpack.c.l.b16 %v237
    %v316 = vunpack.c.h.b16 %v237
    %v317 = vunpack.c.l.b16 %v238
    %v318 = vunpack.c.h.b16 %v238
    %v319 = vunpack.c.l.b16 %v239
    %v320 = vunpack.c.h.b16 %v239
    %v321 = vunpack.c.l.b16 %v240
    %v322 = vunpack.c.h.b16 %v240
    %v323 = vunpack.c.l.b16 %v241
    %v324 = vunpack.c.h.b16 %v241
    %v325 = vunpack.c.l.b16 %v242
    %v326 = vunpack.c.h.b16 %v242
    %v327 = vunpack.c.l.b16 %v243
    %v328 = vunpack.c.h.b16 %v243
    %v329 = vunpack.c.l.b16 %v244
    %v330 = vunpack.c.h.b16 %v244
    %v331 = vunpack.c.l.b16 %v245
    %v332 = vunpack.c.h.b16 %v245
    %v333 = vunpack.c.l.b16 %v246
    %v334 = vunpack.c.h.b16 %v246
    %v335 = vunpack.c.l.b16 %v247
    %v336 = vunpack.c.h.b16 %v247
    %v337 = vunpack.c.l.b16 %v248
    %v338 = vunpack.c.h.b16 %v248
    %v339 = vunpack.c.l.b16 %v249
    %v340 = vunpack.c.h.b16 %v249
    %v341 = vunpack.c.l.b16 %v250
    %v342 = vunpack.c.h.b16 %v250
    %v343 = vunpack.c.l.b16 %v251
    %v344 = vunpack.c.h.b16 %v251
    %v345 = vunpack.c.l.b16 %v252
    %v346 = vunpack.c.h.b16 %v252
    %v347 = vunpack.c.l.b16 %v253
    %v348 = vunpack.c.h.b16 %v253
    %v349 = vunpack.c.l.b16 %v254
    %v350 = vunpack.c.h.b16 %v254
    %v351 = vunpack.c.l.b16 %v255
    %v352 = vunpack.c.h.b16 %v255
    %v353 = vunpack.c.l.b16 %v256
    %v354 = vunpack.c.h.b16 %v256
    %v355 = vunpack.c.l.b16 %v257
    %v356 = vunpack.c.h.b16 %v257
    %v357 = vunpack.c.l.b16 %v258
    %v358 = vunpack.c.h.b16 %v258
    %v359 = vunpack.c.l.b16 %v259
    %v360 = vunpack.c.h.b16 %v259
    %v361 = vunpack.c.l.b16 %v260
    %v362 = vunpack.c.h.b16 %v260
    %v363 = vunpack.c.l.b16 %v261
    %v364 = vunpack.c.h.b16 %v261
    %v365 = vunpack.c.l.b16 %v262
    %v366 = vunpack.c.h.b16 %v262
    %v367 = vunpack.c.l.b16 %v263
    %v368 = vunpack.c.h.b16 %v263
    %v369 = vunpack.c.l.b16 %v264
    %v370 = vunpack.c.h.b16 %v264
    %v371 = vunpack.c.l.b16 %v265
    %v372 = vunpack.c.h.b16 %v265
    %v373 = vunpack.c.l.b16 %v266
    %v374 = vunpack.c.h.b16 %v266
    %v375 = vpack.c.b16 %v313, %v311
    %v376 = vpack.c.b16 %v314, %v312
    %v377 = vpack.c.b16 %v317, %v315
    %v378 = vpack.c.b16 %v318, %v316
    %v379 = vpack.c.b16 %v321, %v319
    %v380 = vpack.c.b16 %v322, %v320
    %v381 = vpack.c.b16 %v325, %v323
    %v382 = vpack.c.b16 %v326, %v324
    %v383 = vpack.c.b16 %v329, %v327
    %v384 = vpack.c.b16 %v330, %v328
    %v385 = vpack.c.b16 %v333, %v331
    %v386 = vpack.c.b16 %v334, %v332
    %v387 = vpack.c.b16 %v337, %v335
    %v388 = vpack.c.b16 %v338, %v336
    %v389 = vpack.c.b16 %v341, %v339
    %v390 = vpack.c.b16 %v342, %v340
    %v391 = vpack.c.b16 %v345, %v343
    %v392 = vpack.c.b16 %v346, %v344
    %v393 = vpack.c.b16 %v349, %v347
    %v394 = vpack.c.b16 %v350, %v348
    %v395 = vpack.c.b16 %v353, %v351
    %v396 = vpack.c.b16 %v354, %v352
    %v397 = vpack.c.b16 %v357, %v355
    %v398 = vpack.c.b16 %v358, %v356
    %v399 = vpack.c.b16 %v361, %v359
    %v400 = vpack.c.b16 %v362, %v360
    %v401 = vpack.c.b16 %v365, %v363
    %v402 = vpack.c.b16 %v366, %v364
    %v403 = vpack.c.b16 %v369, %v367
    %v404 = vpack.c.b16 %v370, %v368
    %v405 = vpack.c.b16 %v373, %v371
    %v406 = vpack.c.b16 %v374, %v372
    %439 = vmatprep.subr.bf16.mxu0 %v390
    %440 = vmatpush1.bf16.msra.mxu0 %v389
    %441 = vmatprep.subr.bf16.mxu0 %v388
    %442 = vmatpush1.bf16.msra.mxu0 %v387
    %443 = vmatprep.subr.bf16.mxu0 %v386
    %444 = vmatpush1.bf16.msra.mxu0 %v385
    %445 = vmatprep.subr.bf16.mxu0 %v384
    %446 = vmatpush1.bf16.msra.mxu0 %v383
    %447 = vmatprep.subr.bf16.mxu0 %v382
    %448 = vmatpush1.bf16.msra.mxu0 %v381
    %449 = vmatprep.subr.bf16.mxu0 %v380
    %450 = vmatpush1.bf16.msra.mxu0 %v379
    %451 = vmatprep.subr.bf16.mxu0 %v378
    %452 = vmatpush1.bf16.msra.mxu0 %v377
    %453 = vmatprep.subr.bf16.mxu0 %v376
    %454 = vmatpush1.bf16.msra.mxu0 %v375
    %455 = vmatprep.subr.bf16.mxu0 %v406
    %456 = vmatpush2.bf16.msra.mxu0 %v405
    %457 = vmatprep.subr.bf16.mxu0 %v404
    %458 = vmatpush2.bf16.msra.mxu0 %v403
    %459 = vmatprep.subr.bf16.mxu0 %v402
    %460 = vmatpush2.bf16.msra.mxu0 %v401
    %461 = vmatprep.subr.bf16.mxu0 %v400
    %462 = vmatpush2.bf16.msra.mxu0 %v399
    %463 = vmatprep.subr.bf16.mxu0 %v398
    %464 = vmatpush2.bf16.msra.mxu0 %v397
    %465 = vmatprep.subr.bf16.mxu0 %v396
    %466 = vmatpush2.bf16.msra.mxu0 %v395
    %467 = vmatprep.subr.bf16.mxu0 %v394
    %468 = vmatpush2.bf16.msra.mxu0 %v393
    %469 = vmatprep.subr.bf16.mxu0 %v392
    %470 = vmatpush2.bf16.msra.mxu0 %v391
    %471 = vmatprep.mubr.bf16.mxu0 %v234
    %472 = vmatmul.mubr.bf16.gmra.mxu0 %v233
    %v473 = vpop.f32.mrf.mxu0
    %v474 = vadd.f32 %v272, %v473
    %v475 = vpop.f32.mrf.mxu0
    %v476 = vadd.f32 %v276, %v475
    %v477 = vpop.f32.mrf.mxu0
    %v478 = vpop.f32.mrf.mxu0
    %479 = vdwg.mxu0
    %v480 = vmax.f32 %v474, 0.0
    %v481 = vmax.f32 %v476, 0.0
    %v482 = vpack.c.bf16 %v480, %v480
    %v483 = vpack.c.bf16 %v481, %v481
    %v484 = vld [vmem:[#allocation8] sm:$0xff]
    %v485 = vld [vmem:[#allocation8 + $0x8] sm:$0xff]
    %v486 = vld [vmem:[#allocation8 + $0x10] sm:$0xf]
    %v487 = vld [vmem:[#allocation8 + $0x14] sm:$0xff]
    %v488 = vld [vmem:[#allocation8 + $0x1c] sm:$0xff]
    %v489 = vld [vmem:[#allocation8 + $0x24] sm:$0xf]
    %v490 = vld [vmem:[#allocation8 + $0x28] sm:$0xff]
    %v491 = vld [vmem:[#allocation8 + $0x30] sm:$0xff]
    %v492 = vld [vmem:[#allocation8 + $0x38] sm:$0xf]
    %v493 = vld [vmem:[#allocation8 + $0x3c] sm:$0xff]
    %v494 = vld [vmem:[#allocation8 + $0x44] sm:$0xff]
    %v495 = vld [vmem:[#allocation8 + $0x4c] sm:$0xf]
    %v496 = vld [vmem:[#allocation8 + $0x50] sm:$0xff]
    %v497 = vld [vmem:[#allocation8 + $0x58] sm:$0xff]
    %v498 = vld [vmem:[#allocation8 + $0x60] sm:$0xf]
    %v499 = vld [vmem:[#allocation8 + $0x64] sm:$0xff]
    %v500 = vld [vmem:[#allocation8 + $0x6c] sm:$0xff]
    %v501 = vld [vmem:[#allocation8 + $0x74] sm:$0xf]
    %v502 = vld [vmem:[#allocation8 + $0x78] sm:$0xff]
    %v503 = vld [vmem:[#allocation8 + $0x80] sm:$0xff]
    %v504 = vld [vmem:[#allocation8 + $0x88] sm:$0xf]
    %v505 = vld [vmem:[#allocation8 + $0x8c] sm:$0xff]
    %v506 = vld [vmem:[#allocation8 + $0x94] sm:$0xff]
    %v507 = vld [vmem:[#allocation8 + $0x9c] sm:$0xf]
    %v508 = vld [vmem:[#allocation8 + $0xa0] sm:$0xff]
    %v509 = vld [vmem:[#allocation8 + $0xa8] sm:$0xff]
    %v510 = vld [vmem:[#allocation8 + $0xb0] sm:$0xf]
    %v511 = vld [vmem:[#allocation8 + $0xb4] sm:$0xff]
    %v512 = vld [vmem:[#allocation8 + $0xbc] sm:$0xff]
    %v513 = vld [vmem:[#allocation8 + $0xc4] sm:$0xf]
    %v514 = vld [vmem:[#allocation8 + $0xc8] sm:$0xff]
    %v515 = vld [vmem:[#allocation8 + $0xd0] sm:$0xff]
    %v516 = vld [vmem:[#allocation8 + $0xd8] sm:$0xf]
    %v517 = vld [vmem:[#allocation8 + $0xdc] sm:$0xff]
    %v518 = vld [vmem:[#allocation8 + $0xe4] sm:$0xff]
    %v519 = vld [vmem:[#allocation8 + $0xec] sm:$0xf]
    %v520 = vld [vmem:[#allocation8 + $0xf0] sm:$0xff]
    %v521 = vld [vmem:[#allocation8 + $0xf8] sm:$0xff]
    %v522 = vld [vmem:[#allocation8 + $0x100] sm:$0xf]
    %v523 = vld [vmem:[#allocation8 + $0x104] sm:$0xff]
    %v524 = vld [vmem:[#allocation8 + $0x10c] sm:$0xff]
    %v525 = vld [vmem:[#allocation8 + $0x114] sm:$0xf]
    %v526 = vld [vmem:[#allocation8 + $0x118] sm:$0xff]
    %v527 = vld [vmem:[#allocation8 + $0x120] sm:$0xff]
    %v528 = vld [vmem:[#allocation8 + $0x128] sm:$0xf]
    %v529 = vld [vmem:[#allocation8 + $0x12c] sm:$0xff]
    %v530 = vld [vmem:[#allocation8 + $0x134] sm:$0xff]
    %v531 = vld [vmem:[#allocation8 + $0x13c] sm:$0xf]
    %v532 = vld [vmem:[#allocation8 + $0x140] sm:$0xff]
    %v533 = vld [vmem:[#allocation8 + $0x148] sm:$0xff]
    %v534 = vld [vmem:[#allocation8 + $0x150] sm:$0xf]
    %v535 = vld [vmem:[#allocation8 + $0x154] sm:$0xff]
    %v536 = vld [vmem:[#allocation8 + $0x15c] sm:$0xff]
    %v537 = vld [vmem:[#allocation8 + $0x164] sm:$0xf]
    %v538 = vld [vmem:[#allocation8 + $0x168] sm:$0xff]
    %v539 = vld [vmem:[#allocation8 + $0x170] sm:$0xff]
    %v540 = vld [vmem:[#allocation8 + $0x178] sm:$0xf]
    %v541 = vld [vmem:[#allocation8 + $0x17c] sm:$0xff]
    %v542 = vld [vmem:[#allocation8 + $0x184] sm:$0xff]
    %v543 = vld [vmem:[#allocation8 + $0x18c] sm:$0xf]
    %v544 = vld [vmem:[#allocation8 + $0x190] sm:$0xff]
    %v545 = vld [vmem:[#allocation8 + $0x198] sm:$0xff]
    %v546 = vld [vmem:[#allocation8 + $0x1a0] sm:$0xf]
    %v547 = vld [vmem:[#allocation8 + $0x1a4] sm:$0xff]
    %v548 = vld [vmem:[#allocation8 + $0x1ac] sm:$0xff]
    %v549 = vld [vmem:[#allocation8 + $0x1b4] sm:$0xf]
    %v550 = vld [vmem:[#allocation8 + $0x1b8] sm:$0xff]
    %v551 = vld [vmem:[#allocation8 + $0x1c0] sm:$0xff]
    %v552 = vld [vmem:[#allocation8 + $0x1c8] sm:$0xf]
    %v553 = vld [vmem:[#allocation8 + $0x1cc] sm:$0xff]
    %v554 = vld [vmem:[#allocation8 + $0x1d4] sm:$0xff]
    %v555 = vld [vmem:[#allocation8 + $0x1dc] sm:$0xf]
    %v556 = vld [vmem:[#allocation8 + $0x1e0] sm:$0xff]
    %v557 = vld [vmem:[#allocation8 + $0x1e8] sm:$0xff]
    %v558 = vld [vmem:[#allocation8 + $0x1f0] sm:$0xf]
    %v559 = vld [vmem:[#allocation8 + $0x1f4] sm:$0xff]
    %v560 = vld [vmem:[#allocation8 + $0x1fc] sm:$0xff]
    %v561 = vld [vmem:[#allocation8 + $0x204] sm:$0xf]
    %v562 = vld [vmem:[#allocation8 + $0x208] sm:$0xff]
    %v563 = vld [vmem:[#allocation8 + $0x210] sm:$0xff]
    %v564 = vld [vmem:[#allocation8 + $0x218] sm:$0xf]
    %v565 = vld [vmem:[#allocation8 + $0x21c] sm:$0xff]
    %v566 = vld [vmem:[#allocation8 + $0x224] sm:$0xff]
    %v567 = vld [vmem:[#allocation8 + $0x22c] sm:$0xf]
    %v568 = vld [vmem:[#allocation8 + $0x230] sm:$0xff]
    %v569 = vld [vmem:[#allocation8 + $0x238] sm:$0xff]
    %v570 = vld [vmem:[#allocation8 + $0x240] sm:$0xf]
    %v571 = vld [vmem:[#allocation8 + $0x244] sm:$0xff]
    %v572 = vld [vmem:[#allocation8 + $0x24c] sm:$0xff]
    %v573 = vld [vmem:[#allocation8 + $0x254] sm:$0xf]
    %v574 = vld [vmem:[#allocation8 + $0x258] sm:$0xff]
    %v575 = vld [vmem:[#allocation8 + $0x260] sm:$0xff]
    %v576 = vld [vmem:[#allocation8 + $0x268] sm:$0xf]
    %v577 = vld [vmem:[#allocation8 + $0x26c] sm:$0xff]
    %v578 = vld [vmem:[#allocation8 + $0x274] sm:$0xff]
    %v579 = vld [vmem:[#allocation8 + $0x27c] sm:$0xf]
    %v580 = vld [vmem:[%s6] sm:$0x1f]
    %v582 = vlaneseq
    %v583 = vshrl.u32 %v582, 7
    %v584 = vsub.s32 0, %v583
    %v585 = vrot.slane %v580, %v584
    %v586 = vlaneseq
    %v587 = vshrl.u32 %v586, 7
    %v588 = vsub.s32 1, %v587
    %v589 = vrot.slane %v580, %v588
    %v590 = vlaneseq
    %v591 = vshrl.u32 %v590, 7
    %v592 = vsub.s32 2, %v591
    %v593 = vrot.slane %v580, %v592
    %v594 = vlaneseq
    %v595 = vshrl.u32 %v594, 7
    %v596 = vsub.s32 3, %v595
    %v597 = vrot.slane %v580, %v596
    %v598 = vlaneseq
    %v599 = vshrl.u32 %v598, 7
    %v600 = vsub.s32 4, %v599
    %v601 = vrot.slane %v580, %v600
    %v703 = vunpack.c.l.b16 %v484
    %v704 = vunpack.c.h.b16 %v484
    %v705 = vunpack.c.l.b16 %v485
    %v706 = vunpack.c.h.b16 %v485
    %v707 = vunpack.c.l.b16 %v486
    %v708 = vunpack.c.l.b16 %v487
    %v709 = vunpack.c.h.b16 %v487
    %v710 = vunpack.c.l.b16 %v488
    %v711 = vunpack.c.h.b16 %v488
    %v712 = vunpack.c.l.b16 %v489
    %v713 = vunpack.c.l.b16 %v490
    %v714 = vunpack.c.h.b16 %v490
    %v715 = vunpack.c.l.b16 %v491
    %v716 = vunpack.c.h.b16 %v491
    %v717 = vunpack.c.l.b16 %v492
    %v718 = vunpack.c.l.b16 %v493
    %v719 = vunpack.c.h.b16 %v493
    %v720 = vunpack.c.l.b16 %v494
    %v721 = vunpack.c.h.b16 %v494
    %v722 = vunpack.c.l.b16 %v495
    %v723 = vunpack.c.l.b16 %v496
    %v724 = vunpack.c.h.b16 %v496
    %v725 = vunpack.c.l.b16 %v497
    %v726 = vunpack.c.h.b16 %v497
    %v727 = vunpack.c.l.b16 %v498
    %v728 = vunpack.c.l.b16 %v499
    %v729 = vunpack.c.h.b16 %v499
    %v730 = vunpack.c.l.b16 %v500
    %v731 = vunpack.c.h.b16 %v500
    %v732 = vunpack.c.l.b16 %v501
    %v733 = vunpack.c.l.b16 %v502
    %v734 = vunpack.c.h.b16 %v502
    %v735 = vunpack.c.l.b16 %v503
    %v736 = vunpack.c.h.b16 %v503
    %v737 = vunpack.c.l.b16 %v504
    %v738 = vunpack.c.l.b16 %v505
    %v739 = vunpack.c.h.b16 %v505
    %v740 = vunpack.c.l.b16 %v506
    %v741 = vunpack.c.h.b16 %v506
    %v742 = vunpack.c.l.b16 %v507
    %v743 = vunpack.c.l.b16 %v508
    %v744 = vunpack.c.h.b16 %v508
    %v745 = vunpack.c.l.b16 %v509
    %v746 = vunpack.c.h.b16 %v509
    %v747 = vunpack.c.l.b16 %v510
    %v748 = vunpack.c.l.b16 %v511
    %v749 = vunpack.c.h.b16 %v511
    %v750 = vunpack.c.l.b16 %v512
    %v751 = vunpack.c.h.b16 %v512
    %v752 = vunpack.c.l.b16 %v513
    %v753 = vunpack.c.l.b16 %v514
    %v754 = vunpack.c.h.b16 %v514
    %v755 = vunpack.c.l.b16 %v515
    %v756 = vunpack.c.h.b16 %v515
    %v757 = vunpack.c.l.b16 %v516
    %v758 = vunpack.c.l.b16 %v517
    %v759 = vunpack.c.h.b16 %v517
    %v760 = vunpack.c.l.b16 %v518
    %v761 = vunpack.c.h.b16 %v518
    %v762 = vunpack.c.l.b16 %v519
    %v763 = vunpack.c.l.b16 %v520
    %v764 = vunpack.c.h.b16 %v520
    %v765 = vunpack.c.l.b16 %v521
    %v766 = vunpack.c.h.b16 %v521
    %v767 = vunpack.c.l.b16 %v522
    %v768 = vunpack.c.l.b16 %v523
    %v769 = vunpack.c.h.b16 %v523
    %v770 = vunpack.c.l.b16 %v524
    %v771 = vunpack.c.h.b16 %v524
    %v772 = vunpack.c.l.b16 %v525
    %v773 = vunpack.c.l.b16 %v526
    %v774 = vunpack.c.h.b16 %v526
    %v775 = vunpack.c.l.b16 %v527
    %v776 = vunpack.c.h.b16 %v527
    %v777 = vunpack.c.l.b16 %v528
    %v778 = vunpack.c.l.b16 %v529
    %v779 = vunpack.c.h.b16 %v529
    %v780 = vunpack.c.l.b16 %v530
    %v781 = vunpack.c.h.b16 %v530
    %v782 = vunpack.c.l.b16 %v531
    %v783 = vunpack.c.l.b16 %v532
    %v784 = vunpack.c.h.b16 %v532
    %v785 = vunpack.c.l.b16 %v533
    %v786 = vunpack.c.h.b16 %v533
    %v787 = vunpack.c.l.b16 %v534
    %v788 = vunpack.c.l.b16 %v535
    %v789 = vunpack.c.h.b16 %v535
    %v790 = vunpack.c.l.b16 %v536
    %v791 = vunpack.c.h.b16 %v536
    %v792 = vunpack.c.l.b16 %v537
    %v793 = vunpack.c.l.b16 %v538
    %v794 = vunpack.c.h.b16 %v538
    %v795 = vunpack.c.l.b16 %v539
    %v796 = vunpack.c.h.b16 %v539
    %v797 = vunpack.c.l.b16 %v540
    %v798 = vunpack.c.l.b16 %v541
    %v799 = vunpack.c.h.b16 %v541
    %v800 = vunpack.c.l.b16 %v542
    %v801 = vunpack.c.h.b16 %v542
    %v802 = vunpack.c.l.b16 %v543
    %v803 = vunpack.c.l.b16 %v544
    %v804 = vunpack.c.h.b16 %v544
    %v805 = vunpack.c.l.b16 %v545
    %v806 = vunpack.c.h.b16 %v545
    %v807 = vunpack.c.l.b16 %v546
    %v808 = vunpack.c.l.b16 %v547
    %v809 = vunpack.c.h.b16 %v547
    %v810 = vunpack.c.l.b16 %v548
    %v811 = vunpack.c.h.b16 %v548
    %v812 = vunpack.c.l.b16 %v549
    %v813 = vunpack.c.l.b16 %v550
    %v814 = vunpack.c.h.b16 %v550
    %v815 = vunpack.c.l.b16 %v551
    %v816 = vunpack.c.h.b16 %v551
    %v817 = vunpack.c.l.b16 %v552
    %v818 = vunpack.c.l.b16 %v553
    %v819 = vunpack.c.h.b16 %v553
    %v820 = vunpack.c.l.b16 %v554
    %v821 = vunpack.c.h.b16 %v554
    %v822 = vunpack.c.l.b16 %v555
    %v823 = vunpack.c.l.b16 %v556
    %v824 = vunpack.c.h.b16 %v556
    %v825 = vunpack.c.l.b16 %v557
    %v826 = vunpack.c.h.b16 %v557
    %v827 = vunpack.c.l.b16 %v558
    %v828 = vunpack.c.l.b16 %v559
    %v829 = vunpack.c.h.b16 %v559
    %v830 = vunpack.c.l.b16 %v560
    %v831 = vunpack.c.h.b16 %v560
    %v832 = vunpack.c.l.b16 %v561
    %v833 = vunpack.c.l.b16 %v562
    %v834 = vunpack.c.h.b16 %v562
    %v835 = vunpack.c.l.b16 %v563
    %v836 = vunpack.c.h.b16 %v563
    %v837 = vunpack.c.l.b16 %v564
    %v838 = vunpack.c.l.b16 %v565
    %v839 = vunpack.c.h.b16 %v565
    %v840 = vunpack.c.l.b16 %v566
    %v841 = vunpack.c.h.b16 %v566
    %v842 = vunpack.c.l.b16 %v567
    %v843 = vunpack.c.l.b16 %v568
    %v844 = vunpack.c.h.b16 %v568
    %v845 = vunpack.c.l.b16 %v569
    %v846 = vunpack.c.h.b16 %v569
    %v847 = vunpack.c.l.b16 %v570
    %v848 = vunpack.c.l.b16 %v571
    %v849 = vunpack.c.h.b16 %v571
    %v850 = vunpack.c.l.b16 %v572
    %v851 = vunpack.c.h.b16 %v572
    %v852 = vunpack.c.l.b16 %v573
    %v853 = vunpack.c.l.b16 %v574
    %v854 = vunpack.c.h.b16 %v574
    %v855 = vunpack.c.l.b16 %v575
    %v856 = vunpack.c.h.b16 %v575
    %v857 = vunpack.c.l.b16 %v576
    %v858 = vunpack.c.l.b16 %v577
    %v859 = vunpack.c.h.b16 %v577
    %v860 = vunpack.c.l.b16 %v578
    %v861 = vunpack.c.h.b16 %v578
    %v862 = vunpack.c.l.b16 %v579
    %v863 = vpack.c.b16 %v708, %v703
    %v864 = vpack.c.b16 %v709, %v704
    %v865 = vpack.c.b16 %v710, %v705
    %v866 = vpack.c.b16 %v711, %v706
    %v867 = vpack.c.b16 %v712, %v707
    %v868 = vpack.c.b16 %v718, %v713
    %v869 = vpack.c.b16 %v719, %v714
    %v870 = vpack.c.b16 %v720, %v715
    %v871 = vpack.c.b16 %v721, %v716
    %v872 = vpack.c.b16 %v722, %v717
    %v873 = vpack.c.b16 %v728, %v723
    %v874 = vpack.c.b16 %v729, %v724
    %v875 = vpack.c.b16 %v730, %v725
    %v876 = vpack.c.b16 %v731, %v726
    %v877 = vpack.c.b16 %v732, %v727
    %v878 = vpack.c.b16 %v738, %v733
    %v879 = vpack.c.b16 %v739, %v734
    %v880 = vpack.c.b16 %v740, %v735
    %v881 = vpack.c.b16 %v741, %v736
    %v882 = vpack.c.b16 %v742, %v737
    %v883 = vpack.c.b16 %v748, %v743
    %v884 = vpack.c.b16 %v749, %v744
    %v885 = vpack.c.b16 %v750, %v745
    %v886 = vpack.c.b16 %v751, %v746
    %v887 = vpack.c.b16 %v752, %v747
    %v888 = vpack.c.b16 %v758, %v753
    %v889 = vpack.c.b16 %v759, %v754
    %v890 = vpack.c.b16 %v760, %v755
    %v891 = vpack.c.b16 %v761, %v756
    %v892 = vpack.c.b16 %v762, %v757
    %v893 = vpack.c.b16 %v768, %v763
    %v894 = vpack.c.b16 %v769, %v764
    %v895 = vpack.c.b16 %v770, %v765
    %v896 = vpack.c.b16 %v771, %v766
    %v897 = vpack.c.b16 %v772, %v767
    %v898 = vpack.c.b16 %v778, %v773
    %v899 = vpack.c.b16 %v779, %v774
    %v900 = vpack.c.b16 %v780, %v775
    %v901 = vpack.c.b16 %v781, %v776
    %v902 = vpack.c.b16 %v782, %v777
    %v903 = vpack.c.b16 %v788, %v783
    %v904 = vpack.c.b16 %v789, %v784
    %v905 = vpack.c.b16 %v790, %v785
    %v906 = vpack.c.b16 %v791, %v786
    %v907 = vpack.c.b16 %v792, %v787
    %v908 = vpack.c.b16 %v798, %v793
    %v909 = vpack.c.b16 %v799, %v794
    %v910 = vpack.c.b16 %v800, %v795
    %v911 = vpack.c.b16 %v801, %v796
    %v912 = vpack.c.b16 %v802, %v797
    %v913 = vpack.c.b16 %v808, %v803
    %v914 = vpack.c.b16 %v809, %v804
    %v915 = vpack.c.b16 %v810, %v805
    %v916 = vpack.c.b16 %v811, %v806
    %v917 = vpack.c.b16 %v812, %v807
    %v918 = vpack.c.b16 %v818, %v813
    %v919 = vpack.c.b16 %v819, %v814
    %v920 = vpack.c.b16 %v820, %v815
    %v921 = vpack.c.b16 %v821, %v816
    %v922 = vpack.c.b16 %v822, %v817
    %v923 = vpack.c.b16 %v828, %v823
    %v924 = vpack.c.b16 %v829, %v824
    %v925 = vpack.c.b16 %v830, %v825
    %v926 = vpack.c.b16 %v831, %v826
    %v927 = vpack.c.b16 %v832, %v827
    %v928 = vpack.c.b16 %v838, %v833
    %v929 = vpack.c.b16 %v839, %v834
    %v930 = vpack.c.b16 %v840, %v835
    %v931 = vpack.c.b16 %v841, %v836
    %v932 = vpack.c.b16 %v842, %v837
    %v933 = vpack.c.b16 %v848, %v843
    %v934 = vpack.c.b16 %v849, %v844
    %v935 = vpack.c.b16 %v850, %v845
    %v936 = vpack.c.b16 %v851, %v846
    %v937 = vpack.c.b16 %v852, %v847
    %v938 = vpack.c.b16 %v858, %v853
    %v939 = vpack.c.b16 %v859, %v854
    %v940 = vpack.c.b16 %v860, %v855
    %v941 = vpack.c.b16 %v861, %v856
    %v942 = vpack.c.b16 %v862, %v857
    %1023 = vmatprep.subr.bf16.mxu0 %v899
    %1024 = vmatpush1.bf16.msra.mxu0 %v898
    %1025 = vmatprep.subr.bf16.mxu0 %v894
    %1026 = vmatpush1.bf16.msra.mxu0 %v893
    %1027 = vmatprep.subr.bf16.mxu0 %v889
    %1028 = vmatpush1.bf16.msra.mxu0 %v888
    %1029 = vmatprep.subr.bf16.mxu0 %v884
    %1030 = vmatpush1.bf16.msra.mxu0 %v883
    %1031 = vmatprep.subr.bf16.mxu0 %v879
    %1032 = vmatpush1.bf16.msra.mxu0 %v878
    %1033 = vmatprep.subr.bf16.mxu0 %v874
    %1034 = vmatpush1.bf16.msra.mxu0 %v873
    %1035 = vmatprep.subr.bf16.mxu0 %v869
    %1036 = vmatpush1.bf16.msra.mxu0 %v868
    %1037 = vmatprep.subr.bf16.mxu0 %v864
    %1038 = vmatpush1.bf16.msra.mxu0 %v863
    %1039 = vmatprep.subr.bf16.mxu0 %v939
    %1040 = vmatpush2.bf16.msra.mxu0 %v938
    %1041 = vmatprep.subr.bf16.mxu0 %v934
    %1042 = vmatpush2.bf16.msra.mxu0 %v933
    %1043 = vmatprep.subr.bf16.mxu0 %v929
    %1044 = vmatpush2.bf16.msra.mxu0 %v928
    %1045 = vmatprep.subr.bf16.mxu0 %v924
    %1046 = vmatpush2.bf16.msra.mxu0 %v923
    %1047 = vmatprep.subr.bf16.mxu0 %v919
    %1048 = vmatpush2.bf16.msra.mxu0 %v918
    %1049 = vmatprep.subr.bf16.mxu0 %v914
    %1050 = vmatpush2.bf16.msra.mxu0 %v913
    %1051 = vmatprep.subr.bf16.mxu0 %v909
    %1052 = vmatpush2.bf16.msra.mxu0 %v908
    %1053 = vmatprep.subr.bf16.mxu0 %v904
    %1054 = vmatpush2.bf16.msra.mxu0 %v903
    %1055 = vmatprep.mubr.bf16.mxu0 %v483
    %1056 = vmatmul.mubr.bf16.gmra.mxu0 %v482
    %v1057 = vpop.f32.mrf.mxu0
    %v1058 = vadd.f32 %v585, %v1057
    %v1059 = vpop.f32.mrf.mxu0
    %v1060 = vadd.f32 %v589, %v1059
    %v1061 = vpop.f32.mrf.mxu0
    %v1062 = vpop.f32.mrf.mxu0
    %1063 = vdwg.mxu0
    %1064 = vmatprep.subr.bf16.mxu0 %v901
    %1065 = vmatpush1.bf16.msra.mxu0 %v900
    %1066 = vmatprep.subr.bf16.mxu0 %v896
    %1067 = vmatpush1.bf16.msra.mxu0 %v895
    %1068 = vmatprep.subr.bf16.mxu0 %v891
    %1069 = vmatpush1.bf16.msra.mxu0 %v890
    %1070 = vmatprep.subr.bf16.mxu0 %v886
    %1071 = vmatpush1.bf16.msra.mxu0 %v885
    %1072 = vmatprep.subr.bf16.mxu0 %v881
    %1073 = vmatpush1.bf16.msra.mxu0 %v880
    %1074 = vmatprep.subr.bf16.mxu0 %v876
    %1075 = vmatpush1.bf16.msra.mxu0 %v875
    %1076 = vmatprep.subr.bf16.mxu0 %v871
    %1077 = vmatpush1.bf16.msra.mxu0 %v870
    %1078 = vmatprep.subr.bf16.mxu0 %v866
    %1079 = vmatpush1.bf16.msra.mxu0 %v865
    %1080 = vmatprep.subr.bf16.mxu0 %v941
    %1081 = vmatpush2.bf16.msra.mxu0 %v940
    %1082 = vmatprep.subr.bf16.mxu0 %v936
    %1083 = vmatpush2.bf16.msra.mxu0 %v935
    %1084 = vmatprep.subr.bf16.mxu0 %v931
    %1085 = vmatpush2.bf16.msra.mxu0 %v930
    %1086 = vmatprep.subr.bf16.mxu0 %v926
    %1087 = vmatpush2.bf16.msra.mxu0 %v925
    %1088 = vmatprep.subr.bf16.mxu0 %v921
    %1089 = vmatpush2.bf16.msra.mxu0 %v920
    %1090 = vmatprep.subr.bf16.mxu0 %v916
    %1091 = vmatpush2.bf16.msra.mxu0 %v915
    %1092 = vmatprep.subr.bf16.mxu0 %v911
    %1093 = vmatpush2.bf16.msra.mxu0 %v910
    %1094 = vmatprep.subr.bf16.mxu0 %v906
    %1095 = vmatpush2.bf16.msra.mxu0 %v905
    %1096 = vmatprep.mubr.bf16.mxu0 %v483
    %1097 = vmatmul.mubr.bf16.gmra.mxu0 %v482
    %v1098 = vpop.f32.mrf.mxu0
    %v1099 = vadd.f32 %v593, %v1098
    %v1100 = vpop.f32.mrf.mxu0
    %v1101 = vadd.f32 %v597, %v1100
    %v1102 = vpop.f32.mrf.mxu0
    %v1103 = vpop.f32.mrf.mxu0
    %1104 = vdwg.mxu0
    %1105 = vmatprep.subr.bf16.mxu0 0
    %1106 = vmatpush1.bf16.msra.mxu0 %v902
    %1107 = vmatprep.subr.bf16.mxu0 0
    %1108 = vmatpush1.bf16.msra.mxu0 %v897
    %1109 = vmatprep.subr.bf16.mxu0 0
    %1110 = vmatpush1.bf16.msra.mxu0 %v892
    %1111 = vmatprep.subr.bf16.mxu0 0
    %1112 = vmatpush1.bf16.msra.mxu0 %v887
    %1113 = vmatprep.subr.bf16.mxu0 0
    %1114 = vmatpush1.bf16.msra.mxu0 %v882
    %1115 = vmatprep.subr.bf16.mxu0 0
    %1116 = vmatpush1.bf16.msra.mxu0 %v877
    %1117 = vmatprep.subr.bf16.mxu0 0
    %1118 = vmatpush1.bf16.msra.mxu0 %v872
    %1119 = vmatprep.subr.bf16.mxu0 0
    %1120 = vmatpush1.bf16.msra.mxu0 %v867
    %1121 = vmatprep.subr.bf16.mxu0 0
    %1122 = vmatpush2.bf16.msra.mxu0 %v942
    %1123 = vmatprep.subr.bf16.mxu0 0
    %1124 = vmatpush2.bf16.msra.mxu0 %v937
    %1125 = vmatprep.subr.bf16.mxu0 0
    %1126 = vmatpush2.bf16.msra.mxu0 %v932
    %1127 = vmatprep.subr.bf16.mxu0 0
    %1128 = vmatpush2.bf16.msra.mxu0 %v927
    %1129 = vmatprep.subr.bf16.mxu0 0
    %1130 = vmatpush2.bf16.msra.mxu0 %v922
    %1131 = vmatprep.subr.bf16.mxu0 0
    %1132 = vmatpush2.bf16.msra.mxu0 %v917
    %1133 = vmatprep.subr.bf16.mxu0 0
    %1134 = vmatpush2.bf16.msra.mxu0 %v912
    %1135 = vmatprep.subr.bf16.mxu0 0
    %1136 = vmatpush2.bf16.msra.mxu0 %v907
    %1137 = vmatprep.mubr.bf16.mxu0 %v483
    %1138 = vmatmul.mubr.bf16.gmra.mxu0 %v482
    %v1139 = vpop.f32.mrf.mxu0
    %v1140 = vadd.f32 %v601, %v1139
    %v1141 = vpop.f32.mrf.mxu0
    %v1142 = vpop.f32.mrf.mxu0
    %v1143 = vpop.f32.mrf.mxu0
    %1144 = vdwg.mxu0
    %1145 = vst [vmem:[#allocation10] sm:$0xff] %v1058
    %1146 = vst [vmem:[#allocation10 + $0x8] sm:$0xff] %v1060
    %1147 = vst [vmem:[#allocation10 + $0x10] sm:$0xff] %v1099
    %1148 = vst [vmem:[#allocation10 + $0x18] sm:$0xff] %v1101
    %vm1149 = vcmask 711680
    %1150 = vst.msk [vmem:[#allocation10 + $0x20] sm:$0xff] %vm1149, %v1140
    // Predicated region
    $region46: #{tpu_custom_call.1} parent=1 // pred_check
      _
    $region47: #{tpu_custom_call.1} parent=1 // pred_check_branch
      %1152 = sbr.rel (0) target = $region49
    $region48: #{tpu_custom_call.1} parent=1 // pred_region
      %s1154 = ssub.s32 640, 640
      %1155 = vsyncadd [#allocation4], %s1154
      %s1157 = sshll.u32 [#allocation10], 4
      %s1158 = int_to_ptr.vmem [resolvable:$true] %s1157
      %1160 = dma.vmem_to_hbm [thread:$0]  %s1158, 640, %s7, [#allocation4]
    $region49: #{tpu_custom_call.1} parent=1 // pred_fallthru
      _
    // Predicated region
    $region50: #{tpu_custom_call.1} parent=1 // pred_check
      _
    $region51: #{tpu_custom_call.1} parent=1 // pred_check_branch
      %1162 = sbr.rel (0) target = $region53
    $region52: #{tpu_custom_call.1} parent=1 // pred_region
      %1163 = dma.done [#allocation4], 640
    $region53: #{tpu_custom_call.1} parent=1 // pred_fallthru
      _
    %1164 = vsyncpa [#allocation3], 1
    %1165 = vsyncpa [#allocation6], 1
    %1166 = vsyncpa [#allocation9], 1
    %1167 = vsyncpa [#allocation4], 1

</llo_original>
